<compile_context>
chip_gen: v5e
topology: v5e:2x2
jax: 0.10.0
libtpu: 0.0.40
codegen_flags: <defaults>
</compile_context>

<pallas_src>
import jax
import jax.numpy as jnp
from jax.experimental import pallas as pl
from jax.experimental.pallas import tpu as pltpu

MAX_PAD = 2   # largest H padding among the branches (kernel 5 -> pad 2)
BN_EPS = 1e-5


# ----------------------------------------------------------------------------
# Kernel: one batch element per grid step.
# ----------------------------------------------------------------------------
def _multi_kernel(x_ref, band_ref, shift_ref, o_ref):
    # x_ref     : (1, W, H*Cin)      bf16  -- one batch element, lane-dense K
    # band_ref  : (H*Cin, 3*H*Cout)  bf16  -- fused 3-branch banded conv weight
    #                                         (BN scale and /3 pre-folded)
    # shift_ref : (1, 3*H*Cout)      f32   -- folded bias/BN shift (already /3)
    # o_ref     : (1, W, H*Cout)     f32   -- lane-dense output
    acc = jnp.dot(x_ref[0], band_ref[...],
                  preferred_element_type=jnp.float32)        # MXU: (W, 3*H*Cout)
    y = jnp.maximum(acc + shift_ref[...], 0.0)               # shift + ReLU (VPU)
    hc = o_ref.shape[-1]                                     # H*Cout (=128 here)
    o_ref[0] = y[:, :hc] + y[:, hc:2 * hc] + y[:, 2 * hc:]   # sum the 3 branches


# ----------------------------------------------------------------------------
# Wrapper
# ----------------------------------------------------------------------------
def multi_forward(x_nchw, packed):
    """x_nchw: (B, Cin, H, W) float32 -> (B, Cout, H, W) float32."""
    B, Cin, H, W = x_nchw.shape
    band = packed["band"]            # (H*Cin, 3*H*Cout) bf16
    shift_row = packed["shift_row"]  # (1, 3*H*Cout)     f32
    K = H * Cin
    N3 = band.shape[1]
    HC = N3 // 3                     # H * Cout
    Cout = HC // H
    assert band.shape[0] == K

    # NCHW -> (B, W, H*Cin); single fused transpose+reshape; bf16 for HBM/MXU.
    xr = jnp.transpose(x_nchw, (0, 3, 2, 1)).reshape(B, W, K).astype(jnp.bfloat16)

    out = pl.pallas_call(
        _multi_kernel,
        out_shape=jax.ShapeDtypeStruct((B, W, HC), jnp.float32),
        grid_spec=pltpu.PrefetchScalarGridSpec(
            num_scalar_prefetch=0,
            grid=(B,),
            in_specs=[
                pl.BlockSpec((1, W, K), lambda b: (b, 0, 0)),
                pl.BlockSpec((K, N3), lambda b: (0, 0)),
                pl.BlockSpec((1, N3), lambda b: (0, 0)),
            ],
            out_specs=pl.BlockSpec((1, W, HC), lambda b: (b, 0, 0)),
        ),
        compiler_params=pltpu.CompilerParams(
            dimension_semantics=("parallel",)),
    )(xr, band, shift_row)

    # (B, W, H*Cout) -> (B, Cout, H, W)
    return jnp.transpose(out.reshape(B, W, H, Cout), (0, 3, 2, 1))


# ----------------------------------------------------------------------------
# Host-side folding: branches + taps + zero-pad + BN scale + /3 -> band matrix.
# ----------------------------------------------------------------------------
def pack_params(params, H):
    Cin = params["w1"].shape[1]
    Cout = params["w1"].shape[-1]
    bands, shifts = [], []
    for idx, k in enumerate((1, 3, 5)):
        w = params[f"w{k}"]                              # (k, Cin, Cout) f32
        scale = params["scale"][idx] / 3.0               # fold BN scale and /3
        shift = params["shift"][idx] / 3.0
        w_eff = w * scale[None, None, :]
        p = (k - 1) // 2
        hp = jnp.arange(H)[:, None]                      # h' : input row
        h = jnp.arange(H)[None, :]                       # h  : output row
        d = hp - h + p                                   # tap index
        valid = (d >= 0) & (d < k)                       # also handles zero-pad
        taps = w_eff[jnp.clip(d, 0, k - 1)]              # (H, H, Cin, Cout)
        taps = jnp.where(valid[:, :, None, None], taps, 0.0)
        band = jnp.transpose(taps, (0, 2, 1, 3)).reshape(H * Cin, H * Cout)
        bands.append(band)
        shifts.append(jnp.tile(shift, (H,)))             # (H*Cout,), h-major
    band = jnp.concatenate(bands, axis=1).astype(jnp.bfloat16)       # (H*Cin, 3*H*Cout)
    shift_row = jnp.concatenate(shifts)[None, :].astype(jnp.float32)  # (1, 3*H*Cout)
    return {"band": band, "shift_row": shift_row}


# ----------------------------------------------------------------------------
# Deterministic synthetic parameters matching Multi(ker=2, indim, dim).
# ----------------------------------------------------------------------------
def make_params(key, indim, dim):
    ks = jax.random.split(key, 18)
    params = {}
    scales, shifts = [], []
    for i, k in enumerate((1, 3, 5)):
        # Conv2d weight (dim, indim, k, 1) -> stored as (k, indim, dim)
        w = 0.1 * jax.random.normal(ks[6 * i + 0], (dim, indim, k, 1), jnp.float32)
        w = jnp.transpose(w[..., 0], (2, 1, 0))          # (k, Cin, Cout)
        bias = 0.1 * jax.random.normal(ks[6 * i + 1], (dim,), jnp.float32)
        gamma = 1.0 + 0.1 * jax.random.normal(ks[6 * i + 2], (dim,), jnp.float32)
        beta = 0.1 * jax.random.normal(ks[6 * i + 3], (dim,), jnp.float32)
        r_mean = 0.1 * jax.random.normal(ks[6 * i + 4], (dim,), jnp.float32)
        r_var = 0.5 + jnp.abs(jax.random.normal(ks[6 * i + 5], (dim,), jnp.float32))
        # Inference-mode BN folded with conv bias into affine (scale, shift).
        eff_scale = gamma / jnp.sqrt(r_var + BN_EPS)
        eff_shift = (bias - r_mean) * eff_scale + beta
        params[f"w{k}"] = w
        scales.append(eff_scale)
        shifts.append(eff_shift)
    params["scale"] = jnp.stack(scales, axis=0)          # (3, Cout)
    params["shift"] = jnp.stack(shifts, axis=0)          # (3, Cout)
    return params


# ----------------------------------------------------------------------------
# Pure-JAX f32 reference (independent of the band/bf16 packing).
# ----------------------------------------------------------------------------
def reference_forward(x_nchw, params):
    x = jnp.transpose(x_nchw, (0, 2, 3, 1))
    H = x.shape[1]
    xp = jnp.pad(x, ((0, 0), (MAX_PAD, MAX_PAD), (0, 0), (0, 0)))

    def branch(w, k, idx):
        p = (k - 1) // 2
        off = MAX_PAD - p
        acc = 0.0
        for dh in range(k):
            acc = acc + jnp.einsum("bhwc,co->bhwo",
                                   xp[:, off + dh: off + dh + H], w[dh])
        return jnp.maximum(acc * params["scale"][idx] + params["shift"][idx], 0.0)

    y = (branch(params["w1"], 1, 0) + branch(params["w3"], 3, 1)
         + branch(params["w5"], 5, 2)) / 3.0
    return jnp.transpose(y, (0, 3, 1, 2))


if __name__ == "__main__":
    key = jax.random.PRNGKey(0)
    k_x, k_p = jax.random.split(key)

    B, indim, dim, H, W = 2, 4, 8, 16, 16
    x = jax.random.normal(k_x, (B, indim, H, W), jnp.float32)
    params = make_params(k_p, indim, dim)
    packed = pack_params(params, H)

    out = jax.block_until_ready(multi_forward(x, packed))
    ref = jax.block_until_ready(reference_forward(x, params))

    assert out.shape == (B, dim, H, W)
    # Tolerance loosened for bf16 inputs/weights (f32 accumulation on the MXU).
    assert jnp.allclose(out, ref, atol=3e-2, rtol=3e-2), "mismatch vs reference"

    print("KERNEL_OK")
</pallas_src>

<mosaic_0001>
module attributes {stable_mosaic.version = 11 : i64} {
  func.func @_multi_kernel(%arg0: i32, %arg1: memref<1x16x64xbf16, #tpu.memory_space<vmem>>, %arg2: memref<64x384xbf16, #tpu.memory_space<vmem>>, %arg3: memref<1x384xf32, #tpu.memory_space<vmem>>, %arg4: memref<1x16x128xf32, #tpu.memory_space<vmem>>) attributes {dimension_semantics = [#tpu.dimension_semantics<parallel>], iteration_bounds = array<i64: 2>, scalar_prefetch = 0 : i64, scratch_operands = 0 : i64, tpu.core_type = #tpu.core_type<tc>, window_params = [{transform_indices = @transform_0, window_bounds = array<i64: 1, 16, 64>}, {pipeline_mode = #tpu.pipeline_mode<synchronous>, transform_indices = @transform_1, window_bounds = array<i64: 64, 384>}, {pipeline_mode = #tpu.pipeline_mode<synchronous>, transform_indices = @transform_2, window_bounds = array<i64: 1, 384>}, {transform_indices = @transform_3, window_bounds = array<i64: 1, 16, 128>}]} {
    %c0 = arith.constant 0 : index
    %c0_0 = arith.constant 0 : index
    %c0_1 = arith.constant 0 : index
    %0 = vector.load %arg1[%c0, %c0_0, %c0_1] : memref<1x16x64xbf16, #tpu.memory_space<vmem>>, vector<1x16x64xbf16>
    %1 = vector.shape_cast %0 : vector<1x16x64xbf16> to vector<16x64xbf16>
    %c0_2 = arith.constant 0 : index
    %c0_3 = arith.constant 0 : index
    %2 = vector.load %arg2[%c0_2, %c0_3] : memref<64x384xbf16, #tpu.memory_space<vmem>>, vector<64x384xbf16>
    %cst = arith.constant dense<0.000000e+00> : vector<16x384xf32>
    %3 = tpu.matmul %1, %2, %cst {dimension_numbers = #tpu.dot_dimension_numbers<[1], [0], [0], [1], [0, 0, 1, 1], [], []>} : vector<16x64xbf16>, vector<64x384xbf16>, vector<16x384xf32> -> vector<16x384xf32>
    %c0_4 = arith.constant 0 : index
    %c0_5 = arith.constant 0 : index
    %4 = vector.load %arg3[%c0_4, %c0_5] : memref<1x384xf32, #tpu.memory_space<vmem>>, vector<1x384xf32>
    %5 = vector.broadcast %4 : vector<1x384xf32> to vector<16x384xf32>
    %6 = arith.addf %3, %5 : vector<16x384xf32>
    %cst_6 = arith.constant 0.000000e+00 : f32
    %7 = vector.broadcast %cst_6 : f32 to vector<16x384xf32>
    %8 = arith.maximumf %6, %7 : vector<16x384xf32>
    %9 = vector.extract_strided_slice %8 {offsets = [0, 0], sizes = [16, 128], strides = [1, 1]} : vector<16x384xf32> to vector<16x128xf32>
    %10 = vector.extract_strided_slice %8 {offsets = [0, 128], sizes = [16, 128], strides = [1, 1]} : vector<16x384xf32> to vector<16x128xf32>
    %11 = arith.addf %9, %10 : vector<16x128xf32>
    %12 = vector.extract_strided_slice %8 {offsets = [0, 256], sizes = [16, 128], strides = [1, 1]} : vector<16x384xf32> to vector<16x128xf32>
    %13 = arith.addf %11, %12 : vector<16x128xf32>
    %c0_7 = arith.constant 0 : index
    %c0_8 = arith.constant 0 : index
    %c0_9 = arith.constant 0 : index
    %14 = vector.load %arg4[%c0_7, %c0_8, %c0_9] : memref<1x16x128xf32, #tpu.memory_space<vmem>>, vector<1x16x128xf32>
    %15 = vector.shape_cast %14 : vector<1x16x128xf32> to vector<16x128xf32>
    %16 = vector.shape_cast %13 : vector<16x128xf32> to vector<1x16x128xf32>
    tpu.vector_store %arg4[%c0_7, %c0_8, %c0_9], %16 {strides = array<i32>} : memref<1x16x128xf32, #tpu.memory_space<vmem>>, vector<1x16x128xf32>,
    return
  }
  func.func @transform_0(%arg0: i32) -> (i32, i32, i32) {
    %c0_i32 = arith.constant 0 : i32
    %c0_i32_0 = arith.constant 0 : i32
    %c0_i32_1 = arith.constant 0 : i32
    return %arg0, %c0_i32, %c0_i32_0 : i32, i32, i32
  }
  func.func @transform_1(%arg0: i32) -> (i32, i32) {
    %c0_i32 = arith.constant 0 : i32
    %c0_i32_0 = arith.constant 0 : i32
    %c0_i32_1 = arith.constant 0 : i32
    return %c0_i32, %c0_i32_0 : i32, i32
  }
  func.func @transform_2(%arg0: i32) -> (i32, i32) {
    %c0_i32 = arith.constant 0 : i32
    %c0_i32_0 = arith.constant 0 : i32
    %c0_i32_1 = arith.constant 0 : i32
    return %c0_i32, %c0_i32_0 : i32, i32
  }
  func.func @transform_3(%arg0: i32) -> (i32, i32, i32) {
    %c0_i32 = arith.constant 0 : i32
    %c0_i32_0 = arith.constant 0 : i32
    %c0_i32_1 = arith.constant 0 : i32
    return %arg0, %c0_i32, %c0_i32_0 : i32, i32, i32
  }
}

</mosaic_0001>

<llo_original>
// kernel: tpu_custom_call.1
$region0: #{tpu_custom_call.1}
  #allocation0 [shape = 'u32[]', space=smem, size = 0x4, offset = 0x4, fixed_abs, tag = 'smem constant byte address 0x4 - core index']
  #allocation1 [shape = 'u32[72,128]{1,0:T(1,128)}', space=vmem, size = 0x9000, scoped, tag = 'internal scratch']
  %s0 = inlined_call_operand.hbm [shape: bf16[2,16,64], index: 0, kind: input, shape index: {}]
  %s1 = inlined_call_operand.hbm [shape: bf16[64,384], index: 1, kind: input, shape index: {}]
  %s2 = inlined_call_operand.hbm [shape: f32[1,384], index: 2, kind: input, shape index: {}]
  %s3 = inlined_call_operand.hbm [shape: f32[2,16,128], index: 3, kind: output, shape index: {}]
  %s4 = sld [smem:[#allocation0]]
  $region57: #{tpu_custom_call.1} parent=0
    _
  %s6 = ssub.s32 1, %s4
  %s7 = scalar_select 0, %s6, %s4
  $region1: #{tpu_custom_call.1} parent=0
    #allocation2 [shape = 'u8[8192]{0}', space=vmem, size = 0x2000, scoped, tag = 'input window, operand 0']
    #allocation3 [shape = 's32[2]{0}', space=sflag, size = 0x8, scoped, tag = 'scoped memory for tpu_custom_call.1']
    #allocation4 [shape = 's32[2]{0}', space=sflag, size = 0x8, scoped, tag = 'scoped memory for tpu_custom_call.1']
    #allocation5 [shape = 'u8[49152]{0}', space=vmem, size = 0xc000, scoped, tag = 'input window, operand 1, single buffered']
    #allocation6 [shape = 's32[1]{0}', space=sflag, size = 0x4, scoped, tag = 'scoped memory for tpu_custom_call.1']
    #allocation7 [shape = 'u8[1536]{0}', space=vmem, size = 0x800, scoped, tag = 'input window, operand 2, single buffered']
    #allocation8 [shape = 'u8[16384]{0}', space=vmem, size = 0x4000, scoped, tag = 'output window, operand 0']
    %8 = vsyncpa [#allocation3], 0
    %s9 = scalar_lea.sflag [#allocation3], 1
    %10 = vsyncpa %s9, 0
    %11 = vsyncpa [#allocation6], 0
    %12 = vsyncpa [#allocation4], 0
    %s13 = scalar_lea.sflag [#allocation4], 1
    %14 = vsyncpa %s13, 0
    loop: start=0, step=1, limit=4
    $region2: #{tpu_custom_call.1} parent=1 // loop_pre_header
      _
    $region3: #{tpu_custom_call.1} parent=1 // loop_header
      %s16 = sphi 0, %s20
      %p17 = scmp.ge.s32.totalorder %s16, 4
      %s26 = sphi 0, %s28
      %s29 = sphi 0, %s26
      %s30 = sphi 0, %s29
      %s46 = sphi 0, %s30
      %s50 = sphi 0, %s50
      %s52 = sphi 0, %s50
      %s53 = sphi 0, %s52
      %s67 = sphi 0, %s53
      %s71 = sphi 0, %s71
      %s73 = sphi 0, %s71
      %s74 = sphi 0, %s73
      %s88 = sphi 0, %s74
      %s94 = sphi 0, %s96
      %s97 = sphi 0, %s94
      %s98 = sphi 0, %s97
      %s114 = sphi 0, %s98
    $region4: #{tpu_custom_call.1} parent=1 // loop_header_branch
      %19 = sbr.rel (%p17) target = $region8
    $region5: #{tpu_custom_call.1} parent=1 // loop_body
      %s21 = ssub.s32 %s16, 1
      %s22 = ssub.s32 %s16, 2
      %s23 = sadd.s32 %s16, 1
      %s24 = ssub.s32 %s16, %s23
      %p25 = scmp.eq.s32.totalorder %s24, 0
      %s27 = sadd.s32 %s26, 1
      %s28 = scalar_select %p25, %s26, %s27
      %p31 = pneg %p25
      %p32 = scmp.eq.s32.totalorder %s16, 1
      %p33 = por %p31, %p32
      %p34 = scmp.ne.s32.totalorder %s26, %s29
      %p35 = scmp.eq.s32.totalorder %s16, 0
      %p36 = por %p34, %p35
      %p37 = scmp.ne.s32.totalorder %s26, %s29
      %p38 = scmp.eq.s32.totalorder %s21, 1
      %p39 = por %p37, %p38
      %p40 = scmp.ne.s32.totalorder %s29, %s30
      %p41 = scmp.eq.s32.totalorder %s21, 0
      %p42 = por %p40, %p41
      %p43 = scmp.ne.s32.totalorder %s29, %s30
      %p44 = scmp.eq.s32.totalorder %s22, 1
      %p45 = por %p43, %p44
      %p47 = scmp.ne.s32.totalorder %s30, %s46
      %p48 = scmp.eq.s32.totalorder %s22, 0
      %p49 = por %p47, %p48
      %s51 = sadd.s32 %s50, 1
      %p54 = scmp.eq.s32.totalorder %s16, 1
      %p55 = scmp.ne.s32.totalorder %s50, %s52
      %p56 = scmp.eq.s32.totalorder %s16, 0
      %p57 = por %p55, %p56
      %p58 = scmp.ne.s32.totalorder %s50, %s52
      %p59 = scmp.eq.s32.totalorder %s21, 1
      %p60 = por %p58, %p59
      %p61 = scmp.ne.s32.totalorder %s52, %s53
      %p62 = scmp.eq.s32.totalorder %s21, 0
      %p63 = por %p61, %p62
      %p64 = scmp.ne.s32.totalorder %s52, %s53
      %p65 = scmp.eq.s32.totalorder %s22, 1
      %p66 = por %p64, %p65
      %p68 = scmp.ne.s32.totalorder %s53, %s67
      %p69 = scmp.eq.s32.totalorder %s22, 0
      %p70 = por %p68, %p69
      %s72 = sadd.s32 %s71, 1
      %p75 = scmp.eq.s32.totalorder %s16, 1
      %p76 = scmp.ne.s32.totalorder %s71, %s73
      %p77 = scmp.eq.s32.totalorder %s16, 0
      %p78 = por %p76, %p77
      %p79 = scmp.ne.s32.totalorder %s71, %s73
      %p80 = scmp.eq.s32.totalorder %s21, 1
      %p81 = por %p79, %p80
      %p82 = scmp.ne.s32.totalorder %s73, %s74
      %p83 = scmp.eq.s32.totalorder %s21, 0
      %p84 = por %p82, %p83
      %p85 = scmp.ne.s32.totalorder %s73, %s74
      %p86 = scmp.eq.s32.totalorder %s22, 1
      %p87 = por %p85, %p86
      %p89 = scmp.ne.s32.totalorder %s74, %s88
      %p90 = scmp.eq.s32.totalorder %s22, 0
      %p91 = por %p89, %p90
      %s92 = ssub.s32 %s16, %s23
      %p93 = scmp.eq.s32.totalorder %s92, 0
      %s95 = sadd.s32 %s94, 1
      %s96 = scalar_select %p93, %s94, %s95
      %p99 = pneg %p93
      %p100 = scmp.eq.s32.totalorder %s16, 1
      %p101 = por %p99, %p100
      %p102 = scmp.ne.s32.totalorder %s94, %s97
      %p103 = scmp.eq.s32.totalorder %s16, 0
      %p104 = por %p102, %p103
      %p105 = scmp.ne.s32.totalorder %s94, %s97
      %p106 = scmp.eq.s32.totalorder %s21, 1
      %p107 = por %p105, %p106
      %p108 = scmp.ne.s32.totalorder %s97, %s98
      %p109 = scmp.eq.s32.totalorder %s21, 0
      %p110 = por %p108, %p109
      %p111 = scmp.ne.s32.totalorder %s97, %s98
      %p112 = scmp.eq.s32.totalorder %s22, 1
      %p113 = por %p111, %p112
      %p115 = scmp.ne.s32.totalorder %s98, %s114
      %p116 = scmp.eq.s32.totalorder %s22, 0
      %p117 = por %p115, %p116
      %p118 = scmp.le.s32.totalorder 1, %s16
      %p119 = scmp.lt.s32.totalorder %s16, 3
      %p120 = pnand %p118, %p119
      %p121 = pneg %p120
      // Predicated region
      $region9: #{tpu_custom_call.1} parent=5 // pred_check
        _
      $region10: #{tpu_custom_call.1} parent=5 // pred_check_branch
        %123 = sbr.rel (%p120) target = $region12
      $region11: #{tpu_custom_call.1} parent=5 // pred_region
        %s124 = ssub.s32 %s16, 1
        // Predicated region
        $region13: #{tpu_custom_call.1} parent=11 // pred_check
          %p125 = pneg %p63
        $region14: #{tpu_custom_call.1} parent=11 // pred_check_branch
          %127 = sbr.rel (%p125) target = $region16
        $region15: #{tpu_custom_call.1} parent=11 // pred_region
          %129 = vsyncadd [#allocation6], 0
          %s130 = sshll.u32 %s1, 4
          %s131 = int_to_ptr.hbm [resolvable:$true] %s130
          %s132 = sshll.u32 [#allocation5], 4
          %s133 = int_to_ptr.vmem [resolvable:$true] %s132
          %138 = dma.hbm_to_vmem [thread:$0]  %s131, 1536, %s133, [#allocation6], 192, 192, 12
        $region16: #{tpu_custom_call.1} parent=11 // pred_fallthru
          _
        // Predicated region
        $region17: #{tpu_custom_call.1} parent=11 // pred_check
          %p139 = pneg %p84
        $region18: #{tpu_custom_call.1} parent=11 // pred_check_branch
          %141 = sbr.rel (%p139) target = $region20
        $region19: #{tpu_custom_call.1} parent=11 // pred_region
          %143 = vsyncadd [#allocation6], 0
          %s145 = sshll.u32 %s2, 4
          %s146 = int_to_ptr.hbm [resolvable:$true] %s145
          %s147 = sshll.u32 [#allocation7], 4
          %s148 = int_to_ptr.vmem [resolvable:$true] %s147
          %150 = dma.hbm_to_vmem [thread:$0]  %s146, 48, %s148, [#allocation6]
        $region20: #{tpu_custom_call.1} parent=11 // pred_fallthru
          _
      $region12: #{tpu_custom_call.1} parent=5 // pred_fallthru
        _
      %p151 = scmp.lt.s32.totalorder %s16, 2
      // Predicated region
      $region21: #{tpu_custom_call.1} parent=5 // pred_check
        %p152 = pneg %p151
      $region22: #{tpu_custom_call.1} parent=5 // pred_check_branch
        %154 = sbr.rel (%p152) target = $region24
      $region23: #{tpu_custom_call.1} parent=5 // pred_region
        // Predicated region
        $region25: #{tpu_custom_call.1} parent=23 // pred_check
          %p155 = pneg %p36
        $region26: #{tpu_custom_call.1} parent=23 // pred_check_branch
          %157 = sbr.rel (%p155) target = $region28
        $region27: #{tpu_custom_call.1} parent=23 // pred_region
          %s158 = sand.u32 %s26, 1
          %s159 = scalar_lea.sflag [#allocation3], %s158
          %s160 = sand.u32 %s26, 1
          %s161 = smul.addr %s160, 8
          %s162 = scalar_lea.vmem [#allocation2], %s161
          %164 = vsyncadd %s159, 0
          %s165 = smul.addr %s16, 2
          %s166 = smul.addr %s165, 4
          %s167 = scalar_lea.hbm %s0, %s166
          %s168 = sshll.u32 %s167, 4
          %s169 = int_to_ptr.hbm [resolvable:$true] %s168
          %s170 = sshll.u32 %s162, 4
          %s171 = int_to_ptr.vmem [resolvable:$true] %s170
          %176 = dma.hbm_to_vmem [thread:$0]  %s169, 128, %s171, %s159, 64, 64, 4
        $region28: #{tpu_custom_call.1} parent=23 // pred_fallthru
          _
      $region24: #{tpu_custom_call.1} parent=5 // pred_fallthru
        _
      %p177 = scmp.le.s32.totalorder 1, %s16
      %p178 = scmp.lt.s32.totalorder %s16, 3
      %p179 = pnand %p177, %p178
      %p180 = pneg %p179
      // Predicated region
      $region29: #{tpu_custom_call.1} parent=5 // pred_check
        _
      $region30: #{tpu_custom_call.1} parent=5 // pred_check_branch
        %182 = sbr.rel (%p179) target = $region32
      $region31: #{tpu_custom_call.1} parent=5 // pred_region
        %s183 = ssub.s32 %s16, 1
        %s184 = sand.u32 %s29, 1
        %s185 = scalar_lea.sflag [#allocation3], %s184
        %s186 = sand.u32 %s29, 1
        %s187 = smul.addr %s186, 8
        %s188 = scalar_lea.vmem [#allocation2], %s187
        // Predicated region
        $region33: #{tpu_custom_call.1} parent=31 // pred_check
          %p189 = pneg %p42
        $region34: #{tpu_custom_call.1} parent=31 // pred_check_branch
          %191 = sbr.rel (%p189) target = $region36
        $region35: #{tpu_custom_call.1} parent=31 // pred_region
          %193 = dma.done %s185, 128
        $region36: #{tpu_custom_call.1} parent=31 // pred_fallthru
          _
        // Predicated region
        $region37: #{tpu_custom_call.1} parent=31 // pred_check
          %p194 = pneg %p63
        $region38: #{tpu_custom_call.1} parent=31 // pred_check_branch
          %196 = sbr.rel (%p194) target = $region40
        $region39: #{tpu_custom_call.1} parent=31 // pred_region
          %198 = dma.done [#allocation6], 1536
        $region40: #{tpu_custom_call.1} parent=31 // pred_fallthru
          _
        // Predicated region
        $region41: #{tpu_custom_call.1} parent=31 // pred_check
          %p199 = pneg %p84
        $region42: #{tpu_custom_call.1} parent=31 // pred_check_branch
          %201 = sbr.rel (%p199) target = $region44
        $region43: #{tpu_custom_call.1} parent=31 // pred_region
          %203 = dma.done [#allocation6], 48
        $region44: #{tpu_custom_call.1} parent=31 // pred_fallthru
          _
        %s204 = sand.u32 %s29, 1
        %s205 = scalar_lea.sflag [#allocation3], %s204
        %s206 = sand.u32 %s29, 1
        %s207 = smul.addr %s206, 8
        %s208 = scalar_lea.vmem [#allocation2], %s207
        %p209 = pneg %p42
        %p210 = pneg %p39
        %p211 = pneg %p63
        %p212 = pneg %p60
        %p213 = pneg %p84
        %p214 = pneg %p81
        %p215 = pneg %p110
        %p216 = pneg %p107
        %s217 = sand.u32 %s97, 1
        %s218 = scalar_lea.sflag [#allocation4], %s217
        %s219 = sand.u32 %s97, 1
        %s220 = smul.addr %s219, 16
        %s221 = scalar_lea.vmem [#allocation8], %s220
        %v223 = vld [vmem:[%s188] sm:$0xf]
        %v224 = vld [vmem:[%s188 + $0x4] sm:$0xf]
        %v225 = vld [vmem:[#allocation5] sm:$0xff]
        %v226 = vld [vmem:[#allocation5 + $0x8] sm:$0xf]
        %v227 = vld [vmem:[#allocation5 + $0xc] sm:$0xff]
        %v228 = vld [vmem:[#allocation5 + $0x14] sm:$0xf]
        %v229 = vld [vmem:[#allocation5 + $0x18] sm:$0xff]
        %v230 = vld [vmem:[#allocation5 + $0x20] sm:$0xf]
        %v231 = vld [vmem:[#allocation5 + $0x24] sm:$0xff]
        %v232 = vld [vmem:[#allocation5 + $0x2c] sm:$0xf]
        %v233 = vld [vmem:[#allocation5 + $0x30] sm:$0xff]
        %v234 = vld [vmem:[#allocation5 + $0x38] sm:$0xf]
        %v235 = vld [vmem:[#allocation5 + $0x3c] sm:$0xff]
        %v236 = vld [vmem:[#allocation5 + $0x44] sm:$0xf]
        %v237 = vld [vmem:[#allocation5 + $0x48] sm:$0xff]
        %v238 = vld [vmem:[#allocation5 + $0x50] sm:$0xf]
        %v239 = vld [vmem:[#allocation5 + $0x54] sm:$0xff]
        %v240 = vld [vmem:[#allocation5 + $0x5c] sm:$0xf]
        %v241 = vld [vmem:[#allocation7] sm:$0x7]
        %v243 = vperm.slane %v241, 0
        %v244 = vperm.slane %v241, 1
        %v245 = vperm.slane %v241, 2
        %v251 = vunpack.c.l.b16 %v223
        %v252 = vunpack.c.l.b16 %v224
        %v253 = vpack.c.b16 %v252, %v251
        %v270 = vunpack.c.l.b16 %v225
        %v271 = vunpack.c.h.b16 %v225
        %v272 = vunpack.c.l.b16 %v226
        %v273 = vunpack.c.l.b16 %v227
        %v274 = vunpack.c.h.b16 %v227
        %v275 = vunpack.c.l.b16 %v228
        %v276 = vunpack.c.l.b16 %v229
        %v277 = vunpack.c.h.b16 %v229
        %v278 = vunpack.c.l.b16 %v230
        %v279 = vunpack.c.l.b16 %v231
        %v280 = vunpack.c.h.b16 %v231
        %v281 = vunpack.c.l.b16 %v232
        %v282 = vunpack.c.l.b16 %v233
        %v283 = vunpack.c.h.b16 %v233
        %v284 = vunpack.c.l.b16 %v234
        %v285 = vunpack.c.l.b16 %v235
        %v286 = vunpack.c.h.b16 %v235
        %v287 = vunpack.c.l.b16 %v236
        %v288 = vunpack.c.l.b16 %v237
        %v289 = vunpack.c.h.b16 %v237
        %v290 = vunpack.c.l.b16 %v238
        %v291 = vunpack.c.l.b16 %v239
        %v292 = vunpack.c.h.b16 %v239
        %v293 = vunpack.c.l.b16 %v240
        %v294 = vpack.c.b16 %v273, %v270
        %v295 = vpack.c.b16 %v274, %v271
        %v296 = vpack.c.b16 %v275, %v272
        %v297 = vpack.c.b16 %v279, %v276
        %v298 = vpack.c.b16 %v280, %v277
        %v299 = vpack.c.b16 %v281, %v278
        %v300 = vpack.c.b16 %v285, %v282
        %v301 = vpack.c.b16 %v286, %v283
        %v302 = vpack.c.b16 %v287, %v284
        %v303 = vpack.c.b16 %v291, %v288
        %v304 = vpack.c.b16 %v292, %v289
        %v305 = vpack.c.b16 %v293, %v290
        %vm318 = vcmask 523264
        %v320 = vsel %vm318, %v253, 0
        %322 = vmatpush.bf16.msra.mxu0 0
        %323 = vmatpush.bf16.msra.mxu0 0
        %324 = vmatpush.bf16.msra.mxu0 0
        %325 = vmatpush.bf16.msra.mxu0 0
        %326 = vmatpush.bf16.msra.mxu0 %v303
        %327 = vmatpush.bf16.msra.mxu0 %v300
        %328 = vmatpush.bf16.msra.mxu0 %v297
        %329 = vmatpush.bf16.msra.mxu0 %v294
        %330 = vmatmul.bf16.gmra.mxu0 %v320
        %v331 = vpop.f32.mrf.mxu0
        %v332 = vadd.f32 %v243, %v331
        %v333 = vpop.f32.mrf.mxu0
        %v334 = vadd.f32 %v243, %v333
        %335 = vdwg.mxu0
        %336 = vmatpush.bf16.msra.mxu0 0
        %337 = vmatpush.bf16.msra.mxu0 0
        %338 = vmatpush.bf16.msra.mxu0 0
        %339 = vmatpush.bf16.msra.mxu0 0
        %340 = vmatpush.bf16.msra.mxu0 %v304
        %341 = vmatpush.bf16.msra.mxu0 %v301
        %342 = vmatpush.bf16.msra.mxu0 %v298
        %343 = vmatpush.bf16.msra.mxu0 %v295
        %344 = vmatmul.bf16.gmra.mxu0 %v320
        %v345 = vpop.f32.mrf.mxu0
        %v346 = vadd.f32 %v244, %v345
        %v347 = vpop.f32.mrf.mxu0
        %v348 = vadd.f32 %v244, %v347
        %349 = vdwg.mxu0
        %350 = vmatpush.bf16.msra.mxu0 0
        %351 = vmatpush.bf16.msra.mxu0 0
        %352 = vmatpush.bf16.msra.mxu0 0
        %353 = vmatpush.bf16.msra.mxu0 0
        %354 = vmatpush.bf16.msra.mxu0 %v305
        %355 = vmatpush.bf16.msra.mxu0 %v302
        %356 = vmatpush.bf16.msra.mxu0 %v299
        %357 = vmatpush.bf16.msra.mxu0 %v296
        %358 = vmatmul.bf16.gmra.mxu0 %v320
        %v359 = vpop.f32.mrf.mxu0
        %v360 = vadd.f32 %v245, %v359
        %v361 = vpop.f32.mrf.mxu0
        %v362 = vadd.f32 %v245, %v361
        %363 = vdwg.mxu0
        %v364 = vmax.f32 %v332, 0.0
        %v365 = vmax.f32 %v346, 0.0
        %v366 = vmax.f32 %v360, 0.0
        %v367 = vmax.f32 %v334, 0.0
        %v368 = vmax.f32 %v348, 0.0
        %v369 = vmax.f32 %v362, 0.0
        %v370 = vadd.f32 %v364, %v365
        %v371 = vadd.f32 %v367, %v368
        %v372 = vadd.f32 %v370, %v366
        %v373 = vadd.f32 %v371, %v369
        %374 = vst [vmem:[%s221] sm:$0xff] %v372
        %375 = vst [vmem:[%s221 + $0x8] sm:$0xff] %v373
        %s376 = sand.u32 %s97, 1
        %s377 = scalar_lea.sflag [#allocation4], %s376
        %s378 = sand.u32 %s97, 1
        %s379 = smul.addr %s378, 16
        %s380 = scalar_lea.vmem [#allocation8], %s379
        // Predicated region
        $region45: #{tpu_custom_call.1} parent=31 // pred_check
          %p381 = pneg %p107
        $region46: #{tpu_custom_call.1} parent=31 // pred_check_branch
          %383 = sbr.rel (%p381) target = $region48
        $region47: #{tpu_custom_call.1} parent=31 // pred_region
          %385 = vsyncadd %s377, 0
          %s386 = smul.addr %s21, 2
          %s387 = smul.addr %s386, 8
          %s388 = scalar_lea.hbm %s3, %s387
          %s389 = sshll.u32 %s380, 4
          %s390 = int_to_ptr.vmem [resolvable:$true] %s389
          %s391 = sshll.u32 %s388, 4
          %s392 = int_to_ptr.hbm [resolvable:$true] %s391
          %397 = dma.vmem_to_hbm [thread:$0]  %s390, 256, %s392, %s377, 128, 128, 8
        $region48: #{tpu_custom_call.1} parent=31 // pred_fallthru
          _
      $region32: #{tpu_custom_call.1} parent=5 // pred_fallthru
        _
      %p398 = scmp.le.s32.totalorder 2, %s16
      // Predicated region
      $region49: #{tpu_custom_call.1} parent=5 // pred_check
        %p399 = pneg %p398
      $region50: #{tpu_custom_call.1} parent=5 // pred_check_branch
        %401 = sbr.rel (%p399) target = $region52
      $region51: #{tpu_custom_call.1} parent=5 // pred_region
        %s402 = ssub.s32 %s16, 2
        // Predicated region
        $region53: #{tpu_custom_call.1} parent=51 // pred_check
          %p403 = pneg %p113
        $region54: #{tpu_custom_call.1} parent=51 // pred_check_branch
          %405 = sbr.rel (%p403) target = $region56
        $region55: #{tpu_custom_call.1} parent=51 // pred_region
          %s406 = sand.u32 %s98, 1
          %s407 = scalar_lea.sflag [#allocation4], %s406
          %s408 = sand.u32 %s98, 1
          %s409 = smul.addr %s408, 16
          %s410 = scalar_lea.vmem [#allocation8], %s409
          %412 = dma.done %s407, 256
        $region56: #{tpu_custom_call.1} parent=51 // pred_fallthru
          _
      $region52: #{tpu_custom_call.1} parent=5 // pred_fallthru
        _
    $region6: #{tpu_custom_call.1} parent=1 // loop_footer
      %s20 = sadd.s32 1, %s16
    $region7: #{tpu_custom_call.1} parent=1 // loop_footer_branch
      %15 = sbr.rel target = $region3
    $region8: #{tpu_custom_call.1} parent=1 // loop_exit
      _
    %413 = vsyncpa [#allocation3], 1
    %s414 = scalar_lea.sflag [#allocation3], 1
    %415 = vsyncpa %s414, 1
    %416 = vsyncpa [#allocation6], 1
    %417 = vsyncpa [#allocation4], 1
    %s418 = scalar_lea.sflag [#allocation4], 1
    %419 = vsyncpa %s418, 1

</llo_original>
